<compile_context>
chip_gen: v5e
topology: v5e:2x2
jax: 0.10.0
libtpu: 0.0.40
codegen_flags: <defaults>
</compile_context>

<pallas_src>
import functools

import jax
import jax.numpy as jnp
from jax.experimental import pallas as pl
from jax.experimental.pallas import tpu as pltpu


def _avg_ce_kernel(logits_ref, labels_ref, out_ref, acc_ref, *, inv_total_rows):
    # logits_ref: [1, TILE_B, C] (input dtype) in VMEM
    # labels_ref: [TILE_B, 1] int32 in VMEM
    # out_ref:    [1, 1] f32 in SMEM (scalar loss, resident across the grid)
    # acc_ref:    [1]    f32 SMEM scratch (running sum of NLL)
    n_i = pl.program_id(0)
    b_i = pl.program_id(1)
    is_first = jnp.logical_and(n_i == 0, b_i == 0)
    is_last = jnp.logical_and(
        n_i == pl.num_programs(0) - 1, b_i == pl.num_programs(1) - 1
    )

    @pl.when(is_first)
    def _():
        acc_ref[0] = jnp.float32(0.0)

    logits = logits_ref[0].astype(jnp.float32)  # [TILE_B, C] f32 math on-chip
    labels = labels_ref[...]                    # [TILE_B, 1] int32

    # Numerically-stable logsumexp along the class (lane) axis.
    m = jnp.max(logits, axis=-1, keepdims=True)                           # [TILE_B, 1]
    lse = jnp.log(jnp.sum(jnp.exp(logits - m), axis=-1, keepdims=True))   # [TILE_B, 1]

    # Label gather via one-hot mask (no dynamic vector gather on TPU).
    classes = jax.lax.broadcasted_iota(jnp.int32, logits.shape, 1)        # [TILE_B, C]
    onehot = (classes == labels).astype(jnp.float32)                      # [TILE_B, C]
    target_logit = jnp.sum(logits * onehot, axis=-1, keepdims=True)       # [TILE_B, 1]

    # -log_softmax(logits)[label] = (m + lse) - logits[label]
    nll = (m + lse) - target_logit                                        # [TILE_B, 1]

    acc_ref[0] += jnp.sum(nll)

    @pl.when(is_last)
    def _():
        out_ref[0, 0] = acc_ref[0] * inv_total_rows


def _choose_tile_rows(batch, num_classes, itemsize, target_bytes=8 << 20):
    """Largest batch tile with one logits buffer <= ~target_bytes.

    Returns either the full batch, or a multiple of 8 that divides it (so the
    (8, 128) block constraint holds and no masking is needed).
    """
    max_rows = max(8, target_bytes // max(1, num_classes * itemsize))
    if batch <= max_rows:
        return batch
    t = (max_rows // 8) * 8
    while t >= 8:
        if batch % t == 0:
            return t
        t -= 8
    # TODO(synk): batch has no multiple-of-8 divisor <= max_rows; fall back to
    # the full batch (may need a raised vmem_limit_bytes for huge odd batches).
    return batch


def average_cross_entropy_loss(outputs, labels, *, tile_rows=None):
    """outputs: list of [B, C] logits (or a pre-stacked [N, B, C] array);
    labels: [B] int class ids.  Returns mean_i cross_entropy(outputs[i], labels)."""
    if isinstance(outputs, (list, tuple)):
        stacked = jnp.stack(list(outputs), axis=0)  # [N, B, C], keeps input dtype
    else:
        stacked = outputs                           # already [N, B, C]: no copy
    n, b, c = stacked.shape
    labels2d = labels.astype(jnp.int32).reshape(b, 1)  # tiny [B, 1], no N*B broadcast

    if tile_rows is None:
        tile_rows = _choose_tile_rows(b, c, stacked.dtype.itemsize)
    assert b % tile_rows == 0, (b, tile_rows)
    num_b_tiles = b // tile_rows

    kernel = functools.partial(
        _avg_ce_kernel, inv_total_rows=1.0 / float(n * b)
    )

    out = pl.pallas_call(
        kernel,
        out_shape=jax.ShapeDtypeStruct((1, 1), jnp.float32),
        grid_spec=pltpu.PrefetchScalarGridSpec(
            num_scalar_prefetch=0,
            grid=(n, num_b_tiles),
            in_specs=[
                pl.BlockSpec((1, tile_rows, c), lambda ni, bi: (ni, bi, 0)),
                pl.BlockSpec((tile_rows, 1), lambda ni, bi: (bi, 0)),
            ],
            out_specs=pl.BlockSpec(
                (1, 1), lambda ni, bi: (0, 0), memory_space=pltpu.SMEM
            ),
            scratch_shapes=[pltpu.SMEM((1,), jnp.float32)],
        ),
        compiler_params=pltpu.CompilerParams(
            dimension_semantics=("arbitrary", "arbitrary")
        ),
    )(stacked, labels2d)
    return out[0, 0]


def _reference(outputs, labels):
    # Pure-JAX reference matching torch.nn.functional.cross_entropy semantics.
    losses = []
    for o in outputs:
        lp = jax.nn.log_softmax(o.astype(jnp.float32), axis=-1)
        nll = -jnp.take_along_axis(
            lp, labels[:, None].astype(jnp.int32), axis=-1
        )[:, 0]
        losses.append(jnp.mean(nll))
    return sum(losses) / len(outputs)


if __name__ == "__main__":
    # Config 1: small shapes from the module spec (3 heads, batch 8, 16 classes).
    key = jax.random.PRNGKey(0)
    n_outputs, batch, n_classes = 3, 8, 16
    keys = jax.random.split(key, n_outputs + 1)
    outputs = [
        jax.random.normal(keys[i], (batch, n_classes), dtype=jnp.float32)
        for i in range(n_outputs)
    ]
    labels = jax.random.randint(keys[-1], (batch,), 0, n_classes, dtype=jnp.int32)

    loss = jax.block_until_ready(average_cross_entropy_loss(outputs, labels))
    ref = _reference(outputs, labels)
    assert jnp.allclose(loss, ref, atol=1e-5, rtol=1e-5), (loss, ref)

    # Config 2: exercise the batch-tiling / accumulation path (tile_rows < batch)
    # and bf16 HBM storage with in-kernel f32 math.
    n2, b2, c2 = 2, 16, 128
    keys2 = jax.random.split(jax.random.PRNGKey(1), n2 + 1)
    outputs2 = [
        jax.random.normal(keys2[i], (b2, c2), dtype=jnp.bfloat16)
        for i in range(n2)
    ]
    labels2 = jax.random.randint(keys2[-1], (b2,), 0, c2, dtype=jnp.int32)
    loss2 = jax.block_until_ready(
        average_cross_entropy_loss(outputs2, labels2, tile_rows=8)
    )
    ref2 = _reference(outputs2, labels2)
    assert jnp.allclose(loss2, ref2, atol=1e-3, rtol=1e-3), (loss2, ref2)

    print("KERNEL_OK")
</pallas_src>

<mosaic_0001>
module attributes {stable_mosaic.version = 11 : i64} {
  func.func @_avg_ce_kernel(%arg0: i32, %arg1: i32, %arg2: memref<1x8x16xf32, #tpu.memory_space<vmem>>, %arg3: memref<8x1xi32, #tpu.memory_space<vmem>>, %arg4: memref<1x1xf32, #tpu.memory_space<smem>>, %arg5: memref<1xf32, #tpu.memory_space<smem>>) attributes {dimension_semantics = [#tpu.dimension_semantics<arbitrary>, #tpu.dimension_semantics<arbitrary>], iteration_bounds = array<i64: 3, 1>, scalar_prefetch = 0 : i64, scratch_operands = 1 : i64, tpu.core_type = #tpu.core_type<tc>, window_params = [{transform_indices = @transform_0, window_bounds = array<i64: 1, 8, 16>}, {transform_indices = @transform_1, window_bounds = array<i64: 8, 1>}, {transform_indices = @transform_2, window_bounds = array<i64: 1, 1>}]} {
    %c0_i32 = arith.constant 0 : i32
    %0 = arith.cmpi eq, %arg0, %c0_i32 : i32
    %c0_i32_0 = arith.constant 0 : i32
    %1 = arith.cmpi eq, %arg1, %c0_i32_0 : i32
    %2 = arith.andi %0, %1 : i1
    %c2_i32 = arith.constant 2 : i32
    %3 = arith.cmpi eq, %arg0, %c2_i32 : i32
    %c0_i32_1 = arith.constant 0 : i32
    %4 = arith.cmpi eq, %arg1, %c0_i32_1 : i32
    %5 = arith.andi %3, %4 : i1
    %6 = arith.extui %2 : i1 to i32
    %c0_i32_2 = arith.constant 0 : i32
    %7 = arith.cmpi ne, %6, %c0_i32_2 : i32
    scf.if %7 {
      %cst_13 = arith.constant 0.000000e+00 : f32
      %c0_14 = arith.constant 0 : index
      %38 = memref.load %arg5[%c0_14] : memref<1xf32, #tpu.memory_space<smem>>
      memref.store %cst_13, %arg5[%c0_14] : memref<1xf32, #tpu.memory_space<smem>>
    } else {
    }
    %c0 = arith.constant 0 : index
    %c0_3 = arith.constant 0 : index
    %c0_4 = arith.constant 0 : index
    %8 = vector.load %arg2[%c0, %c0_3, %c0_4] : memref<1x8x16xf32, #tpu.memory_space<vmem>>, vector<1x8x16xf32>
    %9 = vector.shape_cast %8 : vector<1x8x16xf32> to vector<8x16xf32>
    %c0_5 = arith.constant 0 : index
    %c0_6 = arith.constant 0 : index
    %10 = vector.load %arg3[%c0_5, %c0_6] : memref<8x1xi32, #tpu.memory_space<vmem>>, vector<8x1xi32>
    %cst = arith.constant dense<0xFF800000> : vector<8xf32>
    %11 = vector.multi_reduction <maximumf>, %9, %cst [1] : vector<8x16xf32> to vector<8xf32>
    %12 = vector.shape_cast %11 : vector<8xf32> to vector<8x1xf32>
    %13 = vector.broadcast %12 : vector<8x1xf32> to vector<8x16xf32>
    %14 = arith.subf %9, %13 : vector<8x16xf32>
    %15 = math.exp %14 : vector<8x16xf32>
    %cst_7 = arith.constant dense<0.000000e+00> : vector<8xf32>
    %16 = vector.multi_reduction <add>, %15, %cst_7 [1] : vector<8x16xf32> to vector<8xf32>
    %17 = vector.shape_cast %16 : vector<8xf32> to vector<8x1xf32>
    %18 = math.log %17 : vector<8x1xf32>
    %19 = tpu.iota {dimensions = array<i32: 1>} : vector<8x16xi32>
    %20 = vector.broadcast %10 : vector<8x1xi32> to vector<8x16xi32>
    %21 = arith.cmpi eq, %19, %20 : vector<8x16xi32>
    %22 = arith.extui %21 : vector<8x16xi1> to vector<8x16xi32>
    %23 = arith.sitofp %22 : vector<8x16xi32> to vector<8x16xf32>
    %24 = arith.mulf %9, %23 : vector<8x16xf32>
    %cst_8 = arith.constant dense<0.000000e+00> : vector<8xf32>
    %25 = vector.multi_reduction <add>, %24, %cst_8 [1] : vector<8x16xf32> to vector<8xf32>
    %26 = vector.shape_cast %25 : vector<8xf32> to vector<8x1xf32>
    %27 = arith.addf %12, %18 : vector<8x1xf32>
    %28 = arith.subf %27, %26 : vector<8x1xf32>
    %c0_9 = arith.constant 0 : index
    %29 = memref.load %arg5[%c0_9] : memref<1xf32, #tpu.memory_space<smem>>
    %30 = vector.shape_cast %28 : vector<8x1xf32> to vector<1x8x1xf32>
    %cst_10 = arith.constant dense<0.000000e+00> : vector<1xf32>
    %31 = vector.multi_reduction <add>, %30, %cst_10 [1, 2] : vector<1x8x1xf32> to vector<1xf32>
    %32 = vector.shape_cast %31 : vector<1xf32> to vector<1x1x1xf32>
    %33 = vector.extract %32[0, 0, 0] : f32 from vector<1x1x1xf32>
    %34 = arith.addf %29, %33 : f32
    %c0_11 = arith.constant 0 : index
    %35 = memref.load %arg5[%c0_11] : memref<1xf32, #tpu.memory_space<smem>>
    memref.store %34, %arg5[%c0_11] : memref<1xf32, #tpu.memory_space<smem>>
    %36 = arith.extui %5 : i1 to i32
    %c0_i32_12 = arith.constant 0 : i32
    %37 = arith.cmpi ne, %36, %c0_i32_12 : i32
    scf.if %37 {
      %c0_13 = arith.constant 0 : index
      %38 = memref.load %arg5[%c0_13] : memref<1xf32, #tpu.memory_space<smem>>
      %cst_14 = arith.constant 0.0416666679 : f32
      %39 = arith.mulf %38, %cst_14 : f32
      %c0_15 = arith.constant 0 : index
      %c0_16 = arith.constant 0 : index
      %40 = memref.load %arg4[%c0_15, %c0_16] : memref<1x1xf32, #tpu.memory_space<smem>>
      memref.store %39, %arg4[%c0_15, %c0_16] : memref<1x1xf32, #tpu.memory_space<smem>>
    } else {
    }
    return
  }
  func.func @transform_0(%arg0: i32, %arg1: i32) -> (i32, i32, i32) {
    %c0_i32 = arith.constant 0 : i32
    %c0_i32_0 = arith.constant 0 : i32
    return %arg0, %arg1, %c0_i32 : i32, i32, i32
  }
  func.func @transform_1(%arg0: i32, %arg1: i32) -> (i32, i32) {
    %c0_i32 = arith.constant 0 : i32
    %c0_i32_0 = arith.constant 0 : i32
    return %arg1, %c0_i32 : i32, i32
  }
  func.func @transform_2(%arg0: i32, %arg1: i32) -> (i32, i32) {
    %c0_i32 = arith.constant 0 : i32
    %c0_i32_0 = arith.constant 0 : i32
    %c0_i32_1 = arith.constant 0 : i32
    return %c0_i32, %c0_i32_0 : i32, i32
  }
}

</mosaic_0001>

<llo_original>
// kernel: tpu_custom_call.1
$region0: #{tpu_custom_call.1}
  #allocation0 [shape = 'u32[]', space=smem, size = 0x4, offset = 0x4, fixed_abs, tag = 'smem constant byte address 0x4 - core index']
  #allocation1 [shape = 'u32[72,128]{1,0:T(1,128)}', space=vmem, size = 0x9000, scoped, tag = 'internal scratch']
  #allocation2 [shape = 'f32[1]{0:T(128)}', space=smem, size = 0x200, scoped, tag = 'scratch operand']
  %s0 = inlined_call_operand.hbm [shape: f32[3,8,16], index: 0, kind: input, shape index: {}]
  %s1 = inlined_call_operand.vmem [shape: s32[8,1], index: 1, kind: input, shape index: {}]
  %s2 = inlined_call_operand.hbm [shape: f32[1,1], index: 2, kind: output, shape index: {}]
  %s3 = sld [smem:[#allocation0]]
  $region53: #{tpu_custom_call.1} parent=0
    _
  %s5 = ssub.s32 1, %s3
  %s6 = scalar_select 0, %s5, %s3
  $region1: #{tpu_custom_call.1} parent=0
    #allocation3 [shape = 'u8[8192]{0}', space=vmem, size = 0x2000, scoped, tag = 'input window, operand 0']
    #allocation4 [shape = 's32[2]{0}', space=sflag, size = 0x8, scoped, tag = 'scoped memory for tpu_custom_call.1']
    #allocation5 [shape = 's32[2]{0}', space=sflag, size = 0x8, scoped, tag = 'scoped memory for tpu_custom_call.1']
    #allocation6 [shape = 'u8[512]{0}', space=smem, size = 0x200, scoped, tag = 'output window, operand 0, single buffered']
    %7 = vsyncpa [#allocation4], 0
    %s8 = scalar_lea.sflag [#allocation4], 1
    %9 = vsyncpa %s8, 0
    %10 = vsyncpa [#allocation5], 0
    loop: start=0, step=1, limit=5
    $region2: #{tpu_custom_call.1} parent=1 // loop_pre_header
      _
    $region3: #{tpu_custom_call.1} parent=1 // loop_header
      %s12 = sphi 0, %s16
      %p13 = scmp.ge.s32.totalorder %s12, 5
      %s19 = sphi 0, %s31
      %s20 = sphi 0, %s27
      %s21 = sphi 0, %s19
      %s22 = sphi 0, %s20
      %s23 = sphi 0, %s21
      %s24 = sphi 0, %s22
      %s36 = sphi 0, %s38
      %s39 = sphi 0, %s36
      %s40 = sphi 0, %s39
      %s56 = sphi 0, %s40
      %s62 = sphi 0, %s64
      %s65 = sphi 0, %s62
      %s66 = sphi 0, %s65
      %s82 = sphi 0, %s66
      %s86 = sphi 0, %s86
      %s88 = sphi 0, %s86
      %s89 = sphi 0, %s88
      %s103 = sphi 0, %s89
    $region4: #{tpu_custom_call.1} parent=1 // loop_header_branch
      %15 = sbr.rel (%p13) target = $region8
    $region5: #{tpu_custom_call.1} parent=1 // loop_body
      %s17 = ssub.s32 %s12, 1
      %s18 = ssub.s32 %s12, 2
      %s25 = sadd.s32 1, %s20
      %p26 = scmp.ge.s32.totalorder %s25, 1
      %s27 = scalar_select %p26, 0, %s25
      %s28 = sadd.s32 1, %s19
      %s29 = scalar_select %p26, %s28, %s19
      %p30 = scmp.ge.s32.totalorder %s29, 3
      %s31 = scalar_select %p30, 0, %s29
      %s32 = ssub.s32 %s19, %s31
      %s33 = ssub.s32 %s20, %s27
      %s34 = sor.u32 %s32, %s33
      %p35 = scmp.eq.s32.totalorder %s34, 0
      %s37 = sadd.s32 %s36, 1
      %s38 = scalar_select %p35, %s36, %s37
      %p41 = pneg %p35
      %p42 = scmp.eq.s32.totalorder %s12, 2
      %p43 = por %p41, %p42
      %p44 = scmp.ne.s32.totalorder %s36, %s39
      %p45 = scmp.eq.s32.totalorder %s12, 0
      %p46 = por %p44, %p45
      %p47 = scmp.ne.s32.totalorder %s36, %s39
      %p48 = scmp.eq.s32.totalorder %s17, 2
      %p49 = por %p47, %p48
      %p50 = scmp.ne.s32.totalorder %s39, %s40
      %p51 = scmp.eq.s32.totalorder %s17, 0
      %p52 = por %p50, %p51
      %p53 = scmp.ne.s32.totalorder %s39, %s40
      %p54 = scmp.eq.s32.totalorder %s18, 2
      %p55 = por %p53, %p54
      %p57 = scmp.ne.s32.totalorder %s40, %s56
      %p58 = scmp.eq.s32.totalorder %s18, 0
      %p59 = por %p57, %p58
      %s60 = ssub.s32 %s20, %s27
      %p61 = scmp.eq.s32.totalorder %s60, 0
      %s63 = sadd.s32 %s62, 1
      %s64 = scalar_select %p61, %s62, %s63
      %p67 = pneg %p61
      %p68 = scmp.eq.s32.totalorder %s12, 2
      %p69 = por %p67, %p68
      %p70 = scmp.ne.s32.totalorder %s62, %s65
      %p71 = scmp.eq.s32.totalorder %s12, 0
      %p72 = por %p70, %p71
      %p73 = scmp.ne.s32.totalorder %s62, %s65
      %p74 = scmp.eq.s32.totalorder %s17, 2
      %p75 = por %p73, %p74
      %p76 = scmp.ne.s32.totalorder %s65, %s66
      %p77 = scmp.eq.s32.totalorder %s17, 0
      %p78 = por %p76, %p77
      %p79 = scmp.ne.s32.totalorder %s65, %s66
      %p80 = scmp.eq.s32.totalorder %s18, 2
      %p81 = por %p79, %p80
      %p83 = scmp.ne.s32.totalorder %s66, %s82
      %p84 = scmp.eq.s32.totalorder %s18, 0
      %p85 = por %p83, %p84
      %s87 = sadd.s32 %s86, 1
      %p90 = scmp.eq.s32.totalorder %s12, 2
      %p91 = scmp.ne.s32.totalorder %s86, %s88
      %p92 = scmp.eq.s32.totalorder %s12, 0
      %p93 = por %p91, %p92
      %p94 = scmp.ne.s32.totalorder %s86, %s88
      %p95 = scmp.eq.s32.totalorder %s17, 2
      %p96 = por %p94, %p95
      %p97 = scmp.ne.s32.totalorder %s88, %s89
      %p98 = scmp.eq.s32.totalorder %s17, 0
      %p99 = por %p97, %p98
      %p100 = scmp.ne.s32.totalorder %s88, %s89
      %p101 = scmp.eq.s32.totalorder %s18, 2
      %p102 = por %p100, %p101
      %p104 = scmp.ne.s32.totalorder %s89, %s103
      %p105 = scmp.eq.s32.totalorder %s18, 0
      %p106 = por %p104, %p105
      %p107 = scmp.le.s32.totalorder 1, %s12
      %p108 = scmp.lt.s32.totalorder %s12, 4
      %p109 = pnand %p107, %p108
      %p110 = pneg %p109
      // Predicated region
      $region9: #{tpu_custom_call.1} parent=5 // pred_check
        _
      $region10: #{tpu_custom_call.1} parent=5 // pred_check_branch
        %112 = sbr.rel (%p109) target = $region12
      $region11: #{tpu_custom_call.1} parent=5 // pred_region
        %s113 = ssub.s32 %s12, 1
        // Predicated region
        $region13: #{tpu_custom_call.1} parent=11 // pred_check
          %p114 = pneg %p78
        $region14: #{tpu_custom_call.1} parent=11 // pred_check_branch
          %116 = sbr.rel (%p114) target = $region16
        $region15: #{tpu_custom_call.1} parent=11 // pred_region
          %p117 = scmp.lt.s32.totalorder %s22, 0
          %s118 = scalar_select %p117, %s22, 0
          %s119 = smul.addr %s118, 8
          %s120 = scalar_lea.vmem %s1, %s119
        $region16: #{tpu_custom_call.1} parent=11 // pred_fallthru
          _
      $region12: #{tpu_custom_call.1} parent=5 // pred_fallthru
        _
      %p121 = scmp.lt.s32.totalorder %s12, 3
      // Predicated region
      $region17: #{tpu_custom_call.1} parent=5 // pred_check
        %p122 = pneg %p121
      $region18: #{tpu_custom_call.1} parent=5 // pred_check_branch
        %124 = sbr.rel (%p122) target = $region20
      $region19: #{tpu_custom_call.1} parent=5 // pred_region
        // Predicated region
        $region21: #{tpu_custom_call.1} parent=19 // pred_check
          %p125 = pneg %p46
        $region22: #{tpu_custom_call.1} parent=19 // pred_check_branch
          %127 = sbr.rel (%p125) target = $region24
        $region23: #{tpu_custom_call.1} parent=19 // pred_region
          %s128 = sand.u32 %s36, 1
          %s129 = scalar_lea.sflag [#allocation4], %s128
          %s130 = sand.u32 %s36, 1
          %s131 = smul.addr %s130, 8
          %s132 = scalar_lea.vmem [#allocation3], %s131
          %134 = vsyncadd %s129, 0
          %s135 = sadd.s32 %s20, %s19
          %s136 = smul.addr %s135, 8
          %s137 = scalar_lea.hbm %s0, %s136
          %s139 = sshll.u32 %s137, 4
          %s140 = int_to_ptr.hbm [resolvable:$true] %s139
          %s141 = sshll.u32 %s132, 4
          %s142 = int_to_ptr.vmem [resolvable:$true] %s141
          %144 = dma.hbm_to_vmem [thread:$0]  %s140, 128, %s142, %s129
        $region24: #{tpu_custom_call.1} parent=19 // pred_fallthru
          _
      $region20: #{tpu_custom_call.1} parent=5 // pred_fallthru
        _
      %p145 = scmp.le.s32.totalorder 1, %s12
      %p146 = scmp.lt.s32.totalorder %s12, 4
      %p147 = pnand %p145, %p146
      %p148 = pneg %p147
      // Predicated region
      $region25: #{tpu_custom_call.1} parent=5 // pred_check
        _
      $region26: #{tpu_custom_call.1} parent=5 // pred_check_branch
        %150 = sbr.rel (%p147) target = $region28
      $region27: #{tpu_custom_call.1} parent=5 // pred_region
        %s151 = ssub.s32 %s12, 1
        %s152 = sand.u32 %s39, 1
        %s153 = scalar_lea.sflag [#allocation4], %s152
        %s154 = sand.u32 %s39, 1
        %s155 = smul.addr %s154, 8
        %s156 = scalar_lea.vmem [#allocation3], %s155
        // Predicated region
        $region29: #{tpu_custom_call.1} parent=27 // pred_check
          %p157 = pneg %p52
        $region30: #{tpu_custom_call.1} parent=27 // pred_check_branch
          %159 = sbr.rel (%p157) target = $region32
        $region31: #{tpu_custom_call.1} parent=27 // pred_region
          %161 = dma.done %s153, 128
        $region32: #{tpu_custom_call.1} parent=27 // pred_fallthru
          _
        %s162 = sand.u32 %s39, 1
        %s163 = scalar_lea.sflag [#allocation4], %s162
        %s164 = sand.u32 %s39, 1
        %s165 = smul.addr %s164, 8
        %s166 = scalar_lea.vmem [#allocation3], %s165
        %p167 = pneg %p52
        %p168 = pneg %p49
        %p169 = scmp.lt.s32.totalorder %s22, 0
        %s170 = scalar_select %p169, %s22, 0
        %s171 = smul.addr %s170, 8
        %s172 = scalar_lea.vmem %s1, %s171
        %p173 = pneg %p78
        %p174 = pneg %p75
        %p175 = pneg %p99
        %p176 = pneg %p96
        %p177 = scmp.lt.s32.totalorder %s22, 0
        %s178 = scalar_select %p177, %s22, 0
        %s179 = smul.addr %s178, 8
        %s180 = scalar_lea.vmem %s1, %s179
        %p181 = scmp.eq.s32.totalorder %s21, 0
        %p182 = scmp.eq.s32.totalorder %s22, 0
        %p183 = pnand %p181, %p182
        %p184 = pneg %p183
        %p185 = scmp.eq.s32.totalorder %s21, 2
        %p186 = pnand %p185, %p182
        %p187 = pneg %p186
        // Predicated region
        $region33: #{tpu_custom_call.1} parent=27 // pred_check
          _
        $region34: #{tpu_custom_call.1} parent=27 // pred_check_branch
          %189 = sbr.rel (%p183) target = $region36
        $region35: #{tpu_custom_call.1} parent=27 // pred_region
          %s190 = scalar_lea.smem [#allocation2], 0
          %191 = sst [smem:[%s190]] 0.0
        $region36: #{tpu_custom_call.1} parent=27 // pred_fallthru
          _
        %v192 = vld [vmem:[%s156] sm:$0xff]
        %v193 = vld [vmem:[%s180] sm:$0xff]
        %vm194 = vcmask 130048
        %v195 = vsel %vm194, %v192, -inf
        %196 = vmax.xlane.f32.xlu0 %v195
        %v197 = vpop.xlane.xlu0 %196
        %v198 = vsub.f32 %v192, %v197
        %v199 = vmul.f32 %v198, 1.442695
        %v200 = vpow.pop %v199
        %v201 = vsel %vm194, %v200, 0.0
        %202 = vadd.xlane.f32.xlu0 %v201
        %v203 = vpop.xlane.xlu0 %202
        %v204 = vlog2.pop %v203
        %v205 = vmul.f32 %v204, 0.6931472
        %v206 = vlaneseq
        %v207 = vand.u32 %v206, 127
        %208 = vset.pattern.permute.xlu0 0
        %209 = vperm.xlu0 %208, %v193
        %v210 = vpop.permute.xlu0 %209
        %vm211 = vcmp.eq.s32.totalorder %v207, %v210
        %v212 = vsel %vm211, 1, 0
        %v213 = vcvt.s32.f32 %v212
        %v214 = vmul.f32 %v192, %v213
        %v215 = vsel %vm194, %v214, 0.0
        %216 = vadd.xlane.f32.xlu0 %v215
        %v217 = vpop.xlane.xlu0 %216
        %v218 = vadd.f32 %v197, %v205
        %v219 = vsub.f32 %v218, %v217
        %s220 = sld [smem:[#allocation2]]
        %vm221 = vcmask 7168
        %v222 = vsel %vm221, %v219, 0.0
        %223 = vadd.xlane.f32.xlu0 %v222
        %v224 = vpop.xlane.xlu0 %223
        %v225 = vrot.slane %v224, 4
        %v226 = vadd.f32 %v224, %v225
        %v227 = vrot.slane %v226, 2
        %v228 = vadd.f32 %v226, %v227
        %v229 = vrot.slane %v228, 1
        %v230 = vadd.f32 %v228, %v229
        %s231 = vtos %v230
        %s232 = sadd.f32 %s220, %s231
        %s233 = scalar_lea.smem [#allocation2], 0
        %234 = sst [smem:[%s233]] %s232
        // Predicated region
        $region37: #{tpu_custom_call.1} parent=27 // pred_check
          _
        $region38: #{tpu_custom_call.1} parent=27 // pred_check_branch
          %236 = sbr.rel (%p186) target = $region40
        $region39: #{tpu_custom_call.1} parent=27 // pred_region
          %s237 = sld [smem:[#allocation2]]
          %s238 = smul.f32 %s237, 0.041666668
          %s239 = scalar_lea.smem [#allocation6], 0
          %240 = sst [smem:[%s239]] %s238
        $region40: #{tpu_custom_call.1} parent=27 // pred_fallthru
          _
        // Predicated region
        $region41: #{tpu_custom_call.1} parent=27 // pred_check
          %p241 = pneg %p96
        $region42: #{tpu_custom_call.1} parent=27 // pred_check_branch
          %243 = sbr.rel (%p241) target = $region44
        $region43: #{tpu_custom_call.1} parent=27 // pred_region
          %245 = vsyncadd [#allocation5], 0
          %s247 = sshll.u32 %s2, 4
          %s248 = int_to_ptr.hbm [resolvable:$true] %s247
          %250 = dma.smem_to_hbm [#allocation6], 16, %s248, [#allocation5]
        $region44: #{tpu_custom_call.1} parent=27 // pred_fallthru
          _
        // Predicated region
        $region45: #{tpu_custom_call.1} parent=27 // pred_check
          %p251 = pneg %p96
        $region46: #{tpu_custom_call.1} parent=27 // pred_check_branch
          %253 = sbr.rel (%p251) target = $region48
        $region47: #{tpu_custom_call.1} parent=27 // pred_region
          %255 = dma.done [#allocation5], 16
        $region48: #{tpu_custom_call.1} parent=27 // pred_fallthru
          _
        %256 = sfence
      $region28: #{tpu_custom_call.1} parent=5 // pred_fallthru
        _
      %p257 = scmp.le.s32.totalorder 2, %s12
      // Predicated region
      $region49: #{tpu_custom_call.1} parent=5 // pred_check
        %p258 = pneg %p257
      $region50: #{tpu_custom_call.1} parent=5 // pred_check_branch
        %260 = sbr.rel (%p258) target = $region52
      $region51: #{tpu_custom_call.1} parent=5 // pred_region
        %s261 = ssub.s32 %s12, 2
      $region52: #{tpu_custom_call.1} parent=5 // pred_fallthru
        _
    $region6: #{tpu_custom_call.1} parent=1 // loop_footer
      %s16 = sadd.s32 1, %s12
    $region7: #{tpu_custom_call.1} parent=1 // loop_footer_branch
      %11 = sbr.rel target = $region3
    $region8: #{tpu_custom_call.1} parent=1 // loop_exit
      _
    %262 = vsyncpa [#allocation4], 1
    %s263 = scalar_lea.sflag [#allocation4], 1
    %264 = vsyncpa %s263, 1
    %265 = vsyncpa [#allocation5], 1
    %s266 = scalar_lea.sflag [#allocation5], 1
    %267 = vsyncpa %s266, 1

</llo_original>
